<compile_context>
chip_gen: v7x
topology: tpu7x:2x2x1
jax: 0.10.0
libtpu: 0.0.40
codegen_flags: <defaults>
</compile_context>

<pallas_src>
import jax
import jax.numpy as jnp
from jax.experimental import pallas as pl
from jax.experimental.pallas import tpu as pltpu

IN_FEATURES = 10
OUT_FEATURES = 1
_LANE = 128

# Lane-dense (feature-major) path: VMEM footprint ~192 B/row double-buffered
# (x block pads 10->16 sublanes, out pads 1->8 sublanes), so 131072 rows ~ 24 MiB.
_MAX_TILE_LANE_DENSE = 131072
# Natural-layout path: the (tile, 10) block pads 10 -> 128 lanes in VMEM
# (~512 B/row f32) and the (tile, 1) out block pads the same, so keep it smaller.
_MAX_TILE_ROWS = 8192
_SMALL_BATCH = 4096            # below this, XLA fusion beats a pallas_call launch
_VMEM_LIMIT = 32 * 1024 * 1024  # explicit scoped-VMEM budget; safe on v5e/v6e/v7x


def _round_up(n, m):
    return ((n + m - 1) // m) * m


def _choose_tile(b, max_tile):
    """Lane-aligned row tile, as big as the VMEM budget allows, but split so the
    1-D 'parallel' grid has >= 2 steps (keeps both v7x TensorCores busy)."""
    if b <= _LANE:
        return b                      # single block equal to the array extent
    half = _round_up(pl.cdiv(b, 2), _LANE)
    return min(max_tile, half)


def _lane_dense_kernel(wb_ref, x_ref, o_ref):
    """y[1, TB] = b + sum_k w[k] * x[k, :]   (scalar x vector on the VPU).

    wb_ref: (IN_FEATURES + 1,) f32 SMEM  -- [w_0 .. w_9, bias]
    x_ref : (IN_FEATURES, TB)  VMEM      -- batch on lanes, original dtype
    o_ref : (1, TB)            f32 VMEM  -- lane-dense output slab
    """
    acc = wb_ref[IN_FEATURES] + wb_ref[0] * x_ref[0:1, :].astype(jnp.float32)
    for k in range(1, IN_FEATURES):          # statically unrolled K = 10
        acc = acc + wb_ref[k] * x_ref[k:k + 1, :].astype(jnp.float32)
    o_ref[...] = acc.astype(o_ref.dtype)


def _rows_kernel(b_ref, w_ref, x_ref, o_ref):
    """y[TB, 1] = x[TB, 10] @ w[10, 1] + b   (K=10 contraction on the idle MXU).

    b_ref: (1,)              f32 SMEM
    w_ref: (IN_FEATURES, 1)  VMEM (constant block index -> resident for all steps)
    x_ref: (TB, IN_FEATURES) VMEM (module's natural layout; no wrapper transpose)
    o_ref: (TB, 1)           f32 VMEM
    """
    y = jnp.dot(x_ref[...], w_ref[...], preferred_element_type=jnp.float32)
    o_ref[...] = (y + b_ref[0]).astype(o_ref.dtype)


def _forward_lane_dense(x_t, weight, bias):
    """x_t: (IN_FEATURES, B) feature-major  ->  (B, 1) float32."""
    _, b = x_t.shape
    tile_b = _choose_tile(b, _MAX_TILE_LANE_DENSE)
    grid_b = pl.cdiv(b, tile_b)

    wb = jnp.concatenate(
        [weight.reshape(IN_FEATURES).astype(jnp.float32),
         bias.reshape(OUT_FEATURES).astype(jnp.float32)])       # (11,) -> SMEM

    cost = pl.CostEstimate(
        flops=2 * IN_FEATURES * b,
        transcendentals=0,
        bytes_accessed=x_t.size * x_t.dtype.itemsize + 4 * (b + IN_FEATURES + 1),
    )

    y = pl.pallas_call(
        _lane_dense_kernel,
        out_shape=jax.ShapeDtypeStruct((OUT_FEATURES, b), jnp.float32),
        grid=(grid_b,),
        in_specs=[
            pl.BlockSpec(memory_space=pltpu.MemorySpace.SMEM),        # w + bias
            pl.BlockSpec((IN_FEATURES, tile_b), lambda i: (0, i)),    # x tile
        ],
        out_specs=pl.BlockSpec((OUT_FEATURES, tile_b), lambda i: (0, i)),
        compiler_params=pltpu.CompilerParams(
            dimension_semantics=("parallel",),
            vmem_limit_bytes=_VMEM_LIMIT,
        ),
        cost_estimate=cost,
    )(wb, x_t)
    return y.T                                                   # (B, 1)


def _forward_rows(x, weight, bias):
    """x: (B, IN_FEATURES) natural layout -> (B, 1). No pad / transpose / astype."""
    b, _ = x.shape
    tile_b = _choose_tile(b, _MAX_TILE_ROWS)
    grid_b = pl.cdiv(b, tile_b)

    w_col = weight.reshape(OUT_FEATURES, IN_FEATURES).T.astype(x.dtype)  # (10, 1)
    b_vec = bias.reshape(OUT_FEATURES).astype(jnp.float32)              # (1,)

    cost = pl.CostEstimate(
        flops=2 * IN_FEATURES * b,
        transcendentals=0,
        bytes_accessed=x.size * x.dtype.itemsize + 4 * (b + IN_FEATURES + 1),
    )

    return pl.pallas_call(
        _rows_kernel,
        out_shape=jax.ShapeDtypeStruct((b, OUT_FEATURES), jnp.float32),
        grid=(grid_b,),
        in_specs=[
            pl.BlockSpec(memory_space=pltpu.MemorySpace.SMEM),            # bias
            pl.BlockSpec((IN_FEATURES, OUT_FEATURES), lambda i: (0, 0)),  # weight
            pl.BlockSpec((tile_b, IN_FEATURES), lambda i: (i, 0)),        # x rows
        ],
        out_specs=pl.BlockSpec((tile_b, OUT_FEATURES), lambda i: (i, 0)),
        compiler_params=pltpu.CompilerParams(
            dimension_semantics=("parallel",),
            vmem_limit_bytes=_VMEM_LIMIT,
        ),
        cost_estimate=cost,
    )(b_vec, w_col, x)


def awful_model_forward(x, weight, bias, *, x_is_features_major=False,
                        min_pallas_batch=_SMALL_BATCH):
    """AwfulModel.forward: nn.Linear(10, 1)(sample).

    x: (B, 10), or (10, B) with x_is_features_major=True (preferred upstream
       layout — keeps the kernel output lane-dense with no wrapper transpose,
       which matters most on v7x).
    weight: (1, 10) PyTorch (out_features, in_features) layout; bias: (1,).
    Returns (B, 1) float32.
    """
    if x_is_features_major:
        assert x.shape[0] == IN_FEATURES
        b = x.shape[1]
    else:
        assert x.shape[1] == IN_FEATURES
        b = x.shape[0]
    assert weight.shape == (OUT_FEATURES, IN_FEATURES)

    if b < min_pallas_batch:
        # Tiny batches: pallas_call launch overhead dwarfs the ~1 us of work.
        xr = x.T if x_is_features_major else x
        return (xr.astype(jnp.float32) @ weight.astype(jnp.float32).T
                + bias.reshape(1, OUT_FEATURES).astype(jnp.float32))

    if x_is_features_major:
        return _forward_lane_dense(x, weight, bias)
    return _forward_rows(x, weight, bias)


def init_params(key):
    """Deterministic init mirroring nn.Linear(10, 1): U[-1/sqrt(in), 1/sqrt(in)]."""
    k_w, k_b = jax.random.split(key)
    bound = 1.0 / jnp.sqrt(jnp.float32(IN_FEATURES))
    weight = jax.random.uniform(
        k_w, (OUT_FEATURES, IN_FEATURES), jnp.float32, minval=-bound, maxval=bound)
    bias = jax.random.uniform(
        k_b, (OUT_FEATURES,), jnp.float32, minval=-bound, maxval=bound)
    return weight, bias


if __name__ == "__main__":
    key = jax.random.PRNGKey(0)
    k_params, k_x1, k_x2 = jax.random.split(key, 3)
    weight, bias = init_params(k_params)

    # Small primary example consistent with the module's forward: (batch, 10).
    batch = 8
    x = jax.random.normal(k_x1, (batch, IN_FEATURES), dtype=jnp.float32)
    ref = x @ weight.T + bias

    # 1) Natural-layout Pallas kernel (no pad / no transpose); force past the
    #    small-batch XLA dispatch so the kernel itself is exercised.
    out = jax.block_until_ready(
        awful_model_forward(x, weight, bias, min_pallas_batch=0))
    assert out.shape == (batch, OUT_FEATURES)
    assert jnp.allclose(out, ref, atol=1e-5, rtol=1e-5)

    # 2) Feature-major lane-dense Pallas kernel (preferred layout, esp. v7x).
    out_fm = jax.block_until_ready(
        awful_model_forward(x.T, weight, bias,
                            x_is_features_major=True, min_pallas_batch=0))
    assert out_fm.shape == (batch, OUT_FEATURES)
    assert jnp.allclose(out_fm, ref, atol=1e-5, rtol=1e-5)

    # 3) Batch not a multiple of 128 exercises the masked edge blocks (no padding
    #    copies anywhere in the wrapper).
    x2 = jax.random.normal(k_x2, (300, IN_FEATURES), dtype=jnp.float32)
    ref2 = x2 @ weight.T + bias
    out2 = jax.block_until_ready(
        awful_model_forward(x2, weight, bias, min_pallas_batch=0))
    out2_fm = jax.block_until_ready(
        awful_model_forward(x2.T, weight, bias,
                            x_is_features_major=True, min_pallas_batch=0))
    assert out2.shape == (300, OUT_FEATURES) and out2_fm.shape == (300, OUT_FEATURES)
    assert jnp.allclose(out2, ref2, atol=1e-5, rtol=1e-5)
    assert jnp.allclose(out2_fm, ref2, atol=1e-5, rtol=1e-5)

    # 4) Default dispatch: tiny batches go straight to XLA fusion.
    out_xla = jax.block_until_ready(awful_model_forward(x, weight, bias))
    assert jnp.allclose(out_xla, ref, atol=1e-5, rtol=1e-5)

    print("KERNEL_OK")
</pallas_src>

<mosaic_0001>
module attributes {stable_mosaic.version = 11 : i64} {
  func.func @_rows_kernel(%arg0: i32, %arg1: memref<1xf32, #tpu.memory_space<smem>>, %arg2: memref<10x1xf32, #tpu.memory_space<vmem>>, %arg3: memref<8x10xf32, #tpu.memory_space<vmem>>, %arg4: memref<8x1xf32, #tpu.memory_space<vmem>>) attributes {dimension_semantics = [#tpu.dimension_semantics<parallel>], iteration_bounds = array<i64: 1>, scalar_prefetch = 0 : i64, scratch_operands = 0 : i64, tpu.core_type = #tpu.core_type<tc>, window_params = [{transform_indices = @transform_0, window_bounds = array<i64: 1>}, {pipeline_mode = #tpu.pipeline_mode<synchronous>, transform_indices = @transform_1, window_bounds = array<i64: 10, 1>}, {transform_indices = @transform_2, window_bounds = array<i64: 8, 10>}, {transform_indices = @transform_3, window_bounds = array<i64: 8, 1>}]} {
    %c0 = arith.constant 0 : index
    %c0_0 = arith.constant 0 : index
    %0 = vector.load %arg3[%c0, %c0_0] : memref<8x10xf32, #tpu.memory_space<vmem>>, vector<8x10xf32>
    %c0_1 = arith.constant 0 : index
    %c0_2 = arith.constant 0 : index
    %1 = vector.load %arg2[%c0_1, %c0_2] : memref<10x1xf32, #tpu.memory_space<vmem>>, vector<10x1xf32>
    %cst = arith.constant dense<0.000000e+00> : vector<8x1xf32>
    %2 = tpu.matmul %0, %1, %cst {dimension_numbers = #tpu.dot_dimension_numbers<[1], [0], [0], [1], [0, 0, 1, 1], [], []>} : vector<8x10xf32>, vector<10x1xf32>, vector<8x1xf32> -> vector<8x1xf32>
    %c0_3 = arith.constant 0 : index
    %3 = memref.load %arg1[%c0_3] : memref<1xf32, #tpu.memory_space<smem>>
    %4 = vector.broadcast %3 : f32 to vector<8x1xf32>
    %5 = arith.addf %2, %4 : vector<8x1xf32>
    %c0_4 = arith.constant 0 : index
    %c0_5 = arith.constant 0 : index
    %6 = vector.load %arg4[%c0_4, %c0_5] : memref<8x1xf32, #tpu.memory_space<vmem>>, vector<8x1xf32>
    tpu.vector_store %arg4[%c0_4, %c0_5], %5 {strides = array<i32>} : memref<8x1xf32, #tpu.memory_space<vmem>>, vector<8x1xf32>,
    return
  }
  func.func @transform_0(%arg0: i32) -> i32 {
    %c0_i32 = arith.constant 0 : i32
    %c0_i32_0 = arith.constant 0 : i32
    return %c0_i32 : i32
  }
  func.func @transform_1(%arg0: i32) -> (i32, i32) {
    %c0_i32 = arith.constant 0 : i32
    %c0_i32_0 = arith.constant 0 : i32
    %c0_i32_1 = arith.constant 0 : i32
    return %c0_i32, %c0_i32_0 : i32, i32
  }
  func.func @transform_2(%arg0: i32) -> (i32, i32) {
    %c0_i32 = arith.constant 0 : i32
    %c0_i32_0 = arith.constant 0 : i32
    return %arg0, %c0_i32 : i32, i32
  }
  func.func @transform_3(%arg0: i32) -> (i32, i32) {
    %c0_i32 = arith.constant 0 : i32
    %c0_i32_0 = arith.constant 0 : i32
    return %arg0, %c0_i32 : i32, i32
  }
}

</mosaic_0001>

<llo_original>
// kernel: tpu_custom_call.1
$region0: #{tpu_custom_call.1}
  #allocation0 [shape = 'u32[]', space=smem, size = 0x4, offset = 0x4, fixed_abs, tag = 'smem constant byte address 0x4 - core index']
  #allocation1 [shape = 'u32[144,128]{1,0:T(1,128)}', space=vmem, size = 0x12000, scoped, tag = 'internal scratch']
  #allocation2 [shape = 'f32[1]{0:T(128)S(6)}', space=smem, size = 0x200, scoped, tag = 'scoped memory for tpu_custom_call.1']
  %s0 = inlined_call_operand.<no memory space> [shape: f32[1], index: 0, kind: input, shape index: {}]
  %s1 = inlined_call_operand.vmem [shape: f32[10,1], index: 1, kind: input, shape index: {}]
  %s2 = inlined_call_operand.vmem [shape: f32[8,10], index: 2, kind: input, shape index: {}]
  %s3 = inlined_call_operand.vmem [shape: f32[8,1], index: 3, kind: output, shape index: {}]
  %s4 = sld [smem:[#allocation0]]
  $region22: #{tpu_custom_call.1} parent=0
    _
  %s6 = ssub.s32 1, %s4
  %s7 = scalar_select 0, %s6, %s4
  %8 = sst [smem:[#allocation2]] %s0
  // Predicated region
  $region2: #{tpu_custom_call.1} parent=0 // pred_check
    _
  $region3: #{tpu_custom_call.1} parent=0 // pred_check_branch
    %10 = sbr.rel (0) target = $region5
  $region4: #{tpu_custom_call.1} parent=0 // pred_region
    _
  $region5: #{tpu_custom_call.1} parent=0 // pred_fallthru
    _
  // Predicated region
  $region6: #{tpu_custom_call.1} parent=0 // pred_check
    _
  $region7: #{tpu_custom_call.1} parent=0 // pred_check_branch
    %12 = sbr.rel (0) target = $region9
  $region8: #{tpu_custom_call.1} parent=0 // pred_region
    _
  $region9: #{tpu_custom_call.1} parent=0 // pred_fallthru
    _
  // Predicated region
  $region10: #{tpu_custom_call.1} parent=0 // pred_check
    _
  $region11: #{tpu_custom_call.1} parent=0 // pred_check_branch
    %14 = sbr.rel (0) target = $region13
  $region12: #{tpu_custom_call.1} parent=0 // pred_region
    _
  $region13: #{tpu_custom_call.1} parent=0 // pred_fallthru
    _
  %v15 = vld [vmem:[%s2] sm:$0xff]
  %v16 = vld [vmem:[%s1] sm:$0xff]
  %v17 = vld [vmem:[%s1 + $0x8] sm:$0x3]
  %s18 = sld [smem:[#allocation2]]
  %v19 = vstv %s18
  %vm20 = vcmask 80896
  %v22 = vsel %vm20, %v15, 0
  %vm24 = vcmask 1041408
  %v26 = vsel %vm24, %v17, 0
  %28 = vmatprep.subr.mxu0 0.0
  %29 = vmatpush1.msra.mxu0 %v16
  %30 = vmatprep.subr.mxu0 0.0
  %31 = vmatpush1.msra.mxu0 %v26
  %32 = vmatprep.subr.mxu0 0.0
  %33 = vmatpush1.msra.mxu0 0.0
  %34 = vmatprep.subr.mxu0 0.0
  %35 = vmatpush1.msra.mxu0 0.0
  %36 = vmatprep.subr.mxu0 0.0
  %37 = vmatpush1.msra.mxu0 0.0
  %38 = vmatprep.subr.mxu0 0.0
  %39 = vmatpush1.msra.mxu0 0.0
  %40 = vmatprep.subr.mxu0 0.0
  %41 = vmatpush1.msra.mxu0 0.0
  %42 = vmatprep.subr.mxu0 0.0
  %43 = vmatpush1.msra.mxu0 0.0
  %44 = vmatprep.subr.mxu0 0.0
  %45 = vmatpush1.msra.mxu0 0.0
  %46 = vmatprep.subr.mxu0 0.0
  %47 = vmatpush1.msra.mxu0 0.0
  %48 = vmatprep.subr.mxu0 0.0
  %49 = vmatpush1.msra.mxu0 0.0
  %50 = vmatprep.subr.mxu0 0.0
  %51 = vmatpush1.msra.mxu0 0.0
  %52 = vmatprep.subr.mxu0 0.0
  %53 = vmatpush1.msra.mxu0 0.0
  %54 = vmatprep.subr.mxu0 0.0
  %55 = vmatpush1.msra.mxu0 0.0
  %56 = vmatprep.subr.mxu0 0.0
  %57 = vmatpush1.msra.mxu0 0.0
  %58 = vmatprep.subr.mxu0 0.0
  %59 = vmatpush1.msra.mxu0 0.0
  %60 = vmatprep.subr.mxu0 0.0
  %61 = vmatpush1.msra.mxu0 0.0
  %62 = vmatprep.subr.mxu0 0.0
  %63 = vmatpush1.msra.mxu0 0.0
  %64 = vmatprep.subr.mxu0 0.0
  %65 = vmatpush1.msra.mxu0 0.0
  %66 = vmatprep.subr.mxu0 0.0
  %67 = vmatpush1.msra.mxu0 0.0
  %68 = vmatprep.subr.mxu0 0.0
  %69 = vmatpush1.msra.mxu0 0.0
  %70 = vmatprep.subr.mxu0 0.0
  %71 = vmatpush1.msra.mxu0 0.0
  %72 = vmatprep.subr.mxu0 0.0
  %73 = vmatpush1.msra.mxu0 0.0
  %74 = vmatprep.subr.mxu0 0.0
  %75 = vmatpush1.msra.mxu0 0.0
  %76 = vmatprep.subr.mxu0 0.0
  %77 = vmatpush1.msra.mxu0 0.0
  %78 = vmatprep.subr.mxu0 0.0
  %79 = vmatpush1.msra.mxu0 0.0
  %80 = vmatprep.subr.mxu0 0.0
  %81 = vmatpush1.msra.mxu0 0.0
  %82 = vmatprep.subr.mxu0 0.0
  %83 = vmatpush1.msra.mxu0 0.0
  %84 = vmatprep.subr.mxu0 0.0
  %85 = vmatpush1.msra.mxu0 0.0
  %86 = vmatprep.subr.mxu0 0.0
  %87 = vmatpush1.msra.mxu0 0.0
  %88 = vmatprep.subr.mxu0 0.0
  %89 = vmatpush1.msra.mxu0 0.0
  %90 = vmatprep.subr.mxu0 0.0
  %91 = vmatpush1.msra.mxu0 0.0
  %92 = vmatprep.mubr.f32.mxu0 0.0
  %93 = vmatmul.mubr.f32.gmra.mrb[0].mxu0 %v22
  %v94 = vpop.f32.mrb[0].mxu0
  %v95 = vadd.f32 %v19, %v94
  %v96 = vpop.f32.mrb[0].mxu0
  %97 = vdwg.mxu0
  %vm98 = vcmask 7168
  %99 = vst.msk [vmem:[%s3] sm:$0xff] %vm98, %v95
  // Predicated region
  $region14: #{tpu_custom_call.1} parent=0 // pred_check
    _
  $region15: #{tpu_custom_call.1} parent=0 // pred_check_branch
    %101 = sbr.rel (0) target = $region17
  $region16: #{tpu_custom_call.1} parent=0 // pred_region
    _
  $region17: #{tpu_custom_call.1} parent=0 // pred_fallthru
    _
  // Predicated region
  $region18: #{tpu_custom_call.1} parent=0 // pred_check
    _
  $region19: #{tpu_custom_call.1} parent=0 // pred_check_branch
    %103 = sbr.rel (0) target = $region21
  $region20: #{tpu_custom_call.1} parent=0 // pred_region
    _
  $region21: #{tpu_custom_call.1} parent=0 // pred_fallthru
    _

</llo_original>
